<compile_context>
chip_gen: v7x
topology: tpu7x:2x2x1
jax: 0.10.0
libtpu: 0.0.40
codegen_flags: <defaults>
</compile_context>

<pallas_src>
import jax
import jax.numpy as jnp
from jax.experimental import pallas as pl
from jax.experimental.pallas import tpu as pltpu


def _ode_func_kernel(y_ref, w1_ref, b1_ref, w2_ref, b2_ref, out_ref):
    """One packed batch tile (8 batch rows per sublane row, lane-dense).

    y_ref  : (TBr, 128)   f32   packed activations (8 rows of 16 each)
    w1_ref : (128, 8H)    f32   block-diag kron(I8, W1^T)     (resident)
    b1_ref : (1, 8H)      f32   tiled bias                    (resident)
    w2_ref : (8H, 128)    f32   block-diag kron(I8, W2^T)     (resident)
    b2_ref : (1, 128)     f32   tiled bias                    (resident)
    out_ref: (TBr, 128)   f32   packed output
    """
    h = jnp.dot(y_ref[...], w1_ref[...], preferred_element_type=jnp.float32)
    h = jnp.maximum(h + b1_ref[...], 0.0)                 # (TBr, 8H), full vregs
    o = jnp.dot(h, w2_ref[...], preferred_element_type=jnp.float32)
    out_ref[...] = (o + b2_ref[...]).astype(out_ref.dtype)


def ode_func_forward(t, y, params, *, block_rows=1024):
    """Pallas implementation of ODEFunc.forward(t, y). `t` is ignored.

    y: (batch, 16) f32. Returns (batch, 16) in y.dtype.
    `block_rows` = packed rows per tile (each packed row = 8 batch rows).
    """
    del t
    w1, b1, w2, b2 = params["w1"], params["b1"], params["w2"], params["b2"]
    batch, in_dim = y.shape
    hidden = w1.shape[0]
    out_dtype = y.dtype
    assert 128 % in_dim == 0, "packing trick assumes in_dim divides 128"
    pack = 128 // in_dim                                   # 8 batch rows / packed row

    # Packed-row tiling: last dim is exactly 128 lanes, sublane dim tbr (mult of 8).
    rows = int(pl.cdiv(batch, pack))                       # packed rows needed
    tbr = max(8, min(int(block_rows), ((rows + 7) // 8) * 8))
    tbr = ((tbr + 7) // 8) * 8
    padded_rows = int(pl.cdiv(rows, tbr)) * tbr
    padded_batch = padded_rows * pack

    yf = y.astype(jnp.float32)
    if padded_batch != batch:
        yf = jnp.pad(yf, ((0, padded_batch - batch), (0, 0)))
    # Row-major reinterpretation: (B, 16) -> (B/8, 128).  No transpose.
    y_packed = yf.reshape(padded_rows, pack * in_dim)

    # Block-diagonal weights / tiled biases (built once, VMEM-resident).
    eye = jnp.eye(pack, dtype=jnp.float32)
    w1bd = jnp.kron(eye, w1.T.astype(jnp.float32))         # (128, 8H)
    w2bd = jnp.kron(eye, w2.T.astype(jnp.float32))         # (8H, 128)
    b1bd = jnp.tile(b1.astype(jnp.float32), pack).reshape(1, pack * hidden)
    b2bd = jnp.tile(b2.astype(jnp.float32), pack).reshape(1, pack * in_dim)

    out_packed = pl.pallas_call(
        _ode_func_kernel,
        out_shape=jax.ShapeDtypeStruct((padded_rows, pack * in_dim), jnp.float32),
        grid=(padded_rows // tbr,),
        in_specs=[
            pl.BlockSpec((tbr, pack * in_dim), lambda i: (i, 0)),        # y streams
            pl.BlockSpec((pack * in_dim, pack * hidden), lambda i: (0, 0)),  # resident
            pl.BlockSpec((1, pack * hidden), lambda i: (0, 0)),
            pl.BlockSpec((pack * hidden, pack * in_dim), lambda i: (0, 0)),
            pl.BlockSpec((1, pack * in_dim), lambda i: (0, 0)),
        ],
        out_specs=pl.BlockSpec((tbr, pack * in_dim), lambda i: (i, 0)),
        compiler_params=pltpu.CompilerParams(
            # Batch tiles are independent -> v7x's two TensorCores split them.
            dimension_semantics=("parallel",),
        ),
    )(y_packed, w1bd, b1bd, w2bd, b2bd)

    out = out_packed.reshape(padded_batch, in_dim)[:batch]
    return out.astype(out_dtype)


def init_params(key, hidden_size, in_dim=16, dtype=jnp.float32):
    """Deterministic init matching the PyTorch module:
       weights ~ Normal(0, 0.1), biases = 0."""
    k1, k2 = jax.random.split(key)
    w1 = (0.1 * jax.random.normal(k1, (hidden_size, in_dim))).astype(dtype)
    b1 = jnp.zeros((hidden_size,), dtype)
    w2 = (0.1 * jax.random.normal(k2, (in_dim, hidden_size))).astype(dtype)
    b2 = jnp.zeros((in_dim,), dtype)
    return {"w1": w1, "b1": b1, "w2": w2, "b2": b2}


def _reference(y, params):
    return (jnp.maximum(y @ params["w1"].T + params["b1"], 0.0)
            @ params["w2"].T + params["b2"])


if __name__ == "__main__":
    key = jax.random.PRNGKey(0)
    k_param, k_y1, k_y2 = jax.random.split(key, 3)

    hidden_size = 32
    in_dim = 16
    t = jnp.float32(0.0)  # unused by the forward pass

    params = init_params(k_param, hidden_size, in_dim)

    # Case 1: small, non-multiple-of-8 batch (exercises the padding path).
    y1 = jax.random.normal(k_y1, (250, in_dim), dtype=jnp.float32)
    out1 = jax.block_until_ready(ode_func_forward(t, y1, params))
    assert out1.shape == y1.shape
    assert jnp.allclose(out1, _reference(y1, params), atol=1e-4, rtol=1e-3)

    # Case 2: larger batch with a small tile -> multi-step "parallel" grid.
    y2 = jax.random.normal(k_y2, (2048, in_dim), dtype=jnp.float32)
    out2 = jax.block_until_ready(ode_func_forward(t, y2, params, block_rows=64))
    assert out2.shape == y2.shape
    assert jnp.allclose(out2, _reference(y2, params), atol=1e-4, rtol=1e-3)

    print("KERNEL_OK")
</pallas_src>

<mosaic_0001>
module attributes {stable_mosaic.version = 11 : i64} {
  func.func @_ode_func_kernel(%arg0: i32, %arg1: memref<32x128xf32, #tpu.memory_space<vmem>>, %arg2: memref<128x256xf32, #tpu.memory_space<vmem>>, %arg3: memref<1x256xf32, #tpu.memory_space<vmem>>, %arg4: memref<256x128xf32, #tpu.memory_space<vmem>>, %arg5: memref<1x128xf32, #tpu.memory_space<vmem>>, %arg6: memref<32x128xf32, #tpu.memory_space<vmem>>) attributes {dimension_semantics = [#tpu.dimension_semantics<parallel>], iteration_bounds = array<i64: 1>, scalar_prefetch = 0 : i64, scratch_operands = 0 : i64, tpu.core_type = #tpu.core_type<tc>, window_params = [{transform_indices = @transform_0, window_bounds = array<i64: 32, 128>}, {pipeline_mode = #tpu.pipeline_mode<synchronous>, transform_indices = @transform_1, window_bounds = array<i64: 128, 256>}, {pipeline_mode = #tpu.pipeline_mode<synchronous>, transform_indices = @transform_2, window_bounds = array<i64: 1, 256>}, {pipeline_mode = #tpu.pipeline_mode<synchronous>, transform_indices = @transform_3, window_bounds = array<i64: 256, 128>}, {pipeline_mode = #tpu.pipeline_mode<synchronous>, transform_indices = @transform_4, window_bounds = array<i64: 1, 128>}, {transform_indices = @transform_5, window_bounds = array<i64: 32, 128>}]} {
    %c0 = arith.constant 0 : index
    %c0_0 = arith.constant 0 : index
    %0 = vector.load %arg1[%c0, %c0_0] : memref<32x128xf32, #tpu.memory_space<vmem>>, vector<32x128xf32>
    %c0_1 = arith.constant 0 : index
    %c0_2 = arith.constant 0 : index
    %1 = vector.load %arg2[%c0_1, %c0_2] : memref<128x256xf32, #tpu.memory_space<vmem>>, vector<128x256xf32>
    %cst = arith.constant dense<0.000000e+00> : vector<32x256xf32>
    %2 = tpu.matmul %0, %1, %cst {dimension_numbers = #tpu.dot_dimension_numbers<[1], [0], [0], [1], [0, 0, 1, 1], [], []>} : vector<32x128xf32>, vector<128x256xf32>, vector<32x256xf32> -> vector<32x256xf32>
    %c0_3 = arith.constant 0 : index
    %c0_4 = arith.constant 0 : index
    %3 = vector.load %arg3[%c0_3, %c0_4] : memref<1x256xf32, #tpu.memory_space<vmem>>, vector<1x256xf32>
    %4 = vector.broadcast %3 : vector<1x256xf32> to vector<32x256xf32>
    %5 = arith.addf %2, %4 : vector<32x256xf32>
    %cst_5 = arith.constant 0.000000e+00 : f32
    %6 = vector.broadcast %cst_5 : f32 to vector<32x256xf32>
    %7 = arith.maximumf %5, %6 : vector<32x256xf32>
    %c0_6 = arith.constant 0 : index
    %c0_7 = arith.constant 0 : index
    %8 = vector.load %arg4[%c0_6, %c0_7] : memref<256x128xf32, #tpu.memory_space<vmem>>, vector<256x128xf32>
    %cst_8 = arith.constant dense<0.000000e+00> : vector<32x128xf32>
    %9 = tpu.matmul %7, %8, %cst_8 {dimension_numbers = #tpu.dot_dimension_numbers<[1], [0], [0], [1], [0, 0, 1, 1], [], []>} : vector<32x256xf32>, vector<256x128xf32>, vector<32x128xf32> -> vector<32x128xf32>
    %c0_9 = arith.constant 0 : index
    %c0_10 = arith.constant 0 : index
    %10 = vector.load %arg5[%c0_9, %c0_10] : memref<1x128xf32, #tpu.memory_space<vmem>>, vector<1x128xf32>
    %11 = vector.broadcast %10 : vector<1x128xf32> to vector<32x128xf32>
    %12 = arith.addf %9, %11 : vector<32x128xf32>
    %c0_11 = arith.constant 0 : index
    %c0_12 = arith.constant 0 : index
    %13 = vector.load %arg6[%c0_11, %c0_12] : memref<32x128xf32, #tpu.memory_space<vmem>>, vector<32x128xf32>
    tpu.vector_store %arg6[%c0_11, %c0_12], %12 {strides = array<i32>} : memref<32x128xf32, #tpu.memory_space<vmem>>, vector<32x128xf32>,
    return
  }
  func.func @transform_0(%arg0: i32) -> (i32, i32) {
    %c0_i32 = arith.constant 0 : i32
    %c0_i32_0 = arith.constant 0 : i32
    return %arg0, %c0_i32 : i32, i32
  }
  func.func @transform_1(%arg0: i32) -> (i32, i32) {
    %c0_i32 = arith.constant 0 : i32
    %c0_i32_0 = arith.constant 0 : i32
    %c0_i32_1 = arith.constant 0 : i32
    return %c0_i32, %c0_i32_0 : i32, i32
  }
  func.func @transform_2(%arg0: i32) -> (i32, i32) {
    %c0_i32 = arith.constant 0 : i32
    %c0_i32_0 = arith.constant 0 : i32
    %c0_i32_1 = arith.constant 0 : i32
    return %c0_i32, %c0_i32_0 : i32, i32
  }
  func.func @transform_3(%arg0: i32) -> (i32, i32) {
    %c0_i32 = arith.constant 0 : i32
    %c0_i32_0 = arith.constant 0 : i32
    %c0_i32_1 = arith.constant 0 : i32
    return %c0_i32, %c0_i32_0 : i32, i32
  }
  func.func @transform_4(%arg0: i32) -> (i32, i32) {
    %c0_i32 = arith.constant 0 : i32
    %c0_i32_0 = arith.constant 0 : i32
    %c0_i32_1 = arith.constant 0 : i32
    return %c0_i32, %c0_i32_0 : i32, i32
  }
  func.func @transform_5(%arg0: i32) -> (i32, i32) {
    %c0_i32 = arith.constant 0 : i32
    %c0_i32_0 = arith.constant 0 : i32
    return %arg0, %c0_i32 : i32, i32
  }
}

</mosaic_0001>

<llo_original>
// kernel: tpu_custom_call.1
$region0: #{tpu_custom_call.1}
  #allocation0 [shape = 'u32[]', space=smem, size = 0x4, offset = 0x4, fixed_abs, tag = 'smem constant byte address 0x4 - core index']
  #allocation1 [shape = 'u32[144,128]{1,0:T(1,128)}', space=vmem, size = 0x12000, scoped, tag = 'internal scratch']
  %s0 = inlined_call_operand.hbm [shape: f32[32,128], index: 0, kind: input, shape index: {}]
  %s1 = inlined_call_operand.hbm [shape: f32[128,256], index: 1, kind: input, shape index: {}]
  %s2 = inlined_call_operand.vmem [shape: f32[1,256], index: 2, kind: input, shape index: {}]
  %s3 = inlined_call_operand.hbm [shape: f32[256,128], index: 3, kind: input, shape index: {}]
  %s4 = inlined_call_operand.vmem [shape: f32[1,128], index: 4, kind: input, shape index: {}]
  %s5 = inlined_call_operand.hbm [shape: f32[32,128], index: 5, kind: output, shape index: {}]
  %s6 = sld [smem:[#allocation0]]
  $region42: #{tpu_custom_call.1} parent=0
    _
  %s8 = ssub.s32 1, %s6
  %s9 = scalar_select 0, %s8, %s6
  $region1: #{tpu_custom_call.1} parent=0
    #allocation2 [shape = 'u8[16384]{0}', space=vmem, size = 0x4000, scoped, tag = 'input window, operand 0, single buffered']
    #allocation3 [shape = 's32[1]{0}', space=sflag, size = 0x4, scoped, tag = 'scoped memory for tpu_custom_call.1']
    #allocation4 [shape = 's32[1]{0}', space=sflag, size = 0x4, scoped, tag = 'scoped memory for tpu_custom_call.1']
    #allocation5 [shape = 'u8[131072]{0}', space=vmem, size = 0x20000, scoped, tag = 'input window, operand 1, single buffered']
    #allocation6 [shape = 's32[1]{0}', space=sflag, size = 0x4, scoped, tag = 'scoped memory for tpu_custom_call.1']
    #allocation7 [shape = 'u8[131072]{0}', space=vmem, size = 0x20000, scoped, tag = 'input window, operand 3, single buffered']
    #allocation8 [shape = 'u8[16384]{0}', space=vmem, size = 0x4000, scoped, tag = 'output window, operand 0, single buffered']
    %10 = vsyncpa [#allocation3], 0
    %11 = vsyncpa [#allocation6], 0
    %12 = vsyncpa [#allocation4], 0
    // Predicated region
    $region2: #{tpu_custom_call.1} parent=1 // pred_check
      _
    $region3: #{tpu_custom_call.1} parent=1 // pred_check_branch
      %14 = sbr.rel (0) target = $region5
    $region4: #{tpu_custom_call.1} parent=1 // pred_region
      %s16 = ssub.s32 512, 512
      %17 = vsyncadd [#allocation3], %s16
      %s18 = sshll.u32 [#allocation2], 4
      %s19 = int_to_ptr.vmem [resolvable:$true] %s18
      %24 = dma.hbm_to_vmem [thread:$0]  %s0, 512, %s19, [#allocation3], 128, 128, 8
    $region5: #{tpu_custom_call.1} parent=1 // pred_fallthru
      _
    // Predicated region
    $region6: #{tpu_custom_call.1} parent=1 // pred_check
      _
    $region7: #{tpu_custom_call.1} parent=1 // pred_check_branch
      %26 = sbr.rel (0) target = $region9
    $region8: #{tpu_custom_call.1} parent=1 // pred_region
      %s28 = ssub.s32 4096, 4096
      %29 = vsyncadd [#allocation6], %s28
      %s30 = sshll.u32 [#allocation5], 4
      %s31 = int_to_ptr.vmem [resolvable:$true] %s30
      %36 = dma.hbm_to_vmem [thread:$0]  %s1, 4096, %s31, [#allocation6], 256, 256, 16
    $region9: #{tpu_custom_call.1} parent=1 // pred_fallthru
      _
    // Predicated region
    $region10: #{tpu_custom_call.1} parent=1 // pred_check
      _
    $region11: #{tpu_custom_call.1} parent=1 // pred_check_branch
      %38 = sbr.rel (0) target = $region13
    $region12: #{tpu_custom_call.1} parent=1 // pred_region
      _
    $region13: #{tpu_custom_call.1} parent=1 // pred_fallthru
      _
    // Predicated region
    $region14: #{tpu_custom_call.1} parent=1 // pred_check
      _
    $region15: #{tpu_custom_call.1} parent=1 // pred_check_branch
      %40 = sbr.rel (0) target = $region17
    $region16: #{tpu_custom_call.1} parent=1 // pred_region
      %s42 = ssub.s32 4096, 4096
      %43 = vsyncadd [#allocation6], %s42
      %s44 = sshll.u32 [#allocation7], 4
      %s45 = int_to_ptr.vmem [resolvable:$true] %s44
      %50 = dma.hbm_to_vmem [thread:$0]  %s3, 4096, %s45, [#allocation6], 128, 128, 8
    $region17: #{tpu_custom_call.1} parent=1 // pred_fallthru
      _
    // Predicated region
    $region18: #{tpu_custom_call.1} parent=1 // pred_check
      _
    $region19: #{tpu_custom_call.1} parent=1 // pred_check_branch
      %52 = sbr.rel (0) target = $region21
    $region20: #{tpu_custom_call.1} parent=1 // pred_region
      _
    $region21: #{tpu_custom_call.1} parent=1 // pred_fallthru
      _
    // Predicated region
    $region22: #{tpu_custom_call.1} parent=1 // pred_check
      _
    $region23: #{tpu_custom_call.1} parent=1 // pred_check_branch
      %54 = sbr.rel (0) target = $region25
    $region24: #{tpu_custom_call.1} parent=1 // pred_region
      %55 = dma.done [#allocation3], 512
    $region25: #{tpu_custom_call.1} parent=1 // pred_fallthru
      _
    // Predicated region
    $region26: #{tpu_custom_call.1} parent=1 // pred_check
      _
    $region27: #{tpu_custom_call.1} parent=1 // pred_check_branch
      %57 = sbr.rel (0) target = $region29
    $region28: #{tpu_custom_call.1} parent=1 // pred_region
      %58 = dma.done [#allocation6], 4096
    $region29: #{tpu_custom_call.1} parent=1 // pred_fallthru
      _
    // Predicated region
    $region30: #{tpu_custom_call.1} parent=1 // pred_check
      _
    $region31: #{tpu_custom_call.1} parent=1 // pred_check_branch
      %60 = sbr.rel (0) target = $region33
    $region32: #{tpu_custom_call.1} parent=1 // pred_region
      %61 = dma.done [#allocation6], 4096
    $region33: #{tpu_custom_call.1} parent=1 // pred_fallthru
      _
    %v62 = vld [vmem:[#allocation2] sm:$0xff]
    %v63 = vld [vmem:[#allocation2 + $0x8] sm:$0xff]
    %v64 = vld [vmem:[#allocation2 + $0x10] sm:$0xff]
    %v65 = vld [vmem:[#allocation2 + $0x18] sm:$0xff]
    %v66 = vld [vmem:[#allocation5] sm:$0xff]
    %v67 = vld [vmem:[#allocation5 + $0x8] sm:$0xff]
    %v68 = vld [vmem:[#allocation5 + $0x10] sm:$0xff]
    %v69 = vld [vmem:[#allocation5 + $0x18] sm:$0xff]
    %v70 = vld [vmem:[#allocation5 + $0x20] sm:$0xff]
    %v71 = vld [vmem:[#allocation5 + $0x28] sm:$0xff]
    %v72 = vld [vmem:[#allocation5 + $0x30] sm:$0xff]
    %v73 = vld [vmem:[#allocation5 + $0x38] sm:$0xff]
    %v74 = vld [vmem:[#allocation5 + $0x40] sm:$0xff]
    %v75 = vld [vmem:[#allocation5 + $0x48] sm:$0xff]
    %v76 = vld [vmem:[#allocation5 + $0x50] sm:$0xff]
    %v77 = vld [vmem:[#allocation5 + $0x58] sm:$0xff]
    %v78 = vld [vmem:[#allocation5 + $0x60] sm:$0xff]
    %v79 = vld [vmem:[#allocation5 + $0x68] sm:$0xff]
    %v80 = vld [vmem:[#allocation5 + $0x70] sm:$0xff]
    %v81 = vld [vmem:[#allocation5 + $0x78] sm:$0xff]
    %v82 = vld [vmem:[#allocation5 + $0x80] sm:$0xff]
    %v83 = vld [vmem:[#allocation5 + $0x88] sm:$0xff]
    %v84 = vld [vmem:[#allocation5 + $0x90] sm:$0xff]
    %v85 = vld [vmem:[#allocation5 + $0x98] sm:$0xff]
    %v86 = vld [vmem:[#allocation5 + $0xa0] sm:$0xff]
    %v87 = vld [vmem:[#allocation5 + $0xa8] sm:$0xff]
    %v88 = vld [vmem:[#allocation5 + $0xb0] sm:$0xff]
    %v89 = vld [vmem:[#allocation5 + $0xb8] sm:$0xff]
    %v90 = vld [vmem:[#allocation5 + $0xc0] sm:$0xff]
    %v91 = vld [vmem:[#allocation5 + $0xc8] sm:$0xff]
    %v92 = vld [vmem:[#allocation5 + $0xd0] sm:$0xff]
    %v93 = vld [vmem:[#allocation5 + $0xd8] sm:$0xff]
    %v94 = vld [vmem:[#allocation5 + $0xe0] sm:$0xff]
    %v95 = vld [vmem:[#allocation5 + $0xe8] sm:$0xff]
    %v96 = vld [vmem:[#allocation5 + $0xf0] sm:$0xff]
    %v97 = vld [vmem:[#allocation5 + $0xf8] sm:$0xff]
    %v98 = vld [vmem:[%s2] sm:$0x3]
    %v100 = vlaneseq
    %v101 = vshrl.u32 %v100, 7
    %v102 = vsub.s32 0, %v101
    %v103 = vrot.slane %v98, %v102
    %v104 = vlaneseq
    %v105 = vshrl.u32 %v104, 7
    %v106 = vsub.s32 1, %v105
    %v107 = vrot.slane %v98, %v106
    %110 = vmatprep.subr.mxu0 %v67
    %111 = vmatpush1.msra.mxu0 %v66
    %112 = vmatprep.subr.mxu0 %v69
    %113 = vmatpush1.msra.mxu0 %v68
    %114 = vmatprep.subr.mxu0 %v71
    %115 = vmatpush1.msra.mxu0 %v70
    %116 = vmatprep.subr.mxu0 %v73
    %117 = vmatpush1.msra.mxu0 %v72
    %118 = vmatprep.subr.mxu0 %v75
    %119 = vmatpush1.msra.mxu0 %v74
    %120 = vmatprep.subr.mxu0 %v77
    %121 = vmatpush1.msra.mxu0 %v76
    %122 = vmatprep.subr.mxu0 %v79
    %123 = vmatpush1.msra.mxu0 %v78
    %124 = vmatprep.subr.mxu0 %v81
    %125 = vmatpush1.msra.mxu0 %v80
    %126 = vmatprep.subr.mxu0 %v83
    %127 = vmatpush1.msra.mxu0 %v82
    %128 = vmatprep.subr.mxu0 %v85
    %129 = vmatpush1.msra.mxu0 %v84
    %130 = vmatprep.subr.mxu0 %v87
    %131 = vmatpush1.msra.mxu0 %v86
    %132 = vmatprep.subr.mxu0 %v89
    %133 = vmatpush1.msra.mxu0 %v88
    %134 = vmatprep.subr.mxu0 %v91
    %135 = vmatpush1.msra.mxu0 %v90
    %136 = vmatprep.subr.mxu0 %v93
    %137 = vmatpush1.msra.mxu0 %v92
    %138 = vmatprep.subr.mxu0 %v95
    %139 = vmatpush1.msra.mxu0 %v94
    %140 = vmatprep.subr.mxu0 %v97
    %141 = vmatpush1.msra.mxu0 %v96
    %142 = vmatprep.subr.mxu0 0.0
    %143 = vmatpush1.msra.mxu0 0.0
    %144 = vmatprep.subr.mxu0 0.0
    %145 = vmatpush1.msra.mxu0 0.0
    %146 = vmatprep.subr.mxu0 0.0
    %147 = vmatpush1.msra.mxu0 0.0
    %148 = vmatprep.subr.mxu0 0.0
    %149 = vmatpush1.msra.mxu0 0.0
    %150 = vmatprep.subr.mxu0 0.0
    %151 = vmatpush1.msra.mxu0 0.0
    %152 = vmatprep.subr.mxu0 0.0
    %153 = vmatpush1.msra.mxu0 0.0
    %154 = vmatprep.subr.mxu0 0.0
    %155 = vmatpush1.msra.mxu0 0.0
    %156 = vmatprep.subr.mxu0 0.0
    %157 = vmatpush1.msra.mxu0 0.0
    %158 = vmatprep.subr.mxu0 0.0
    %159 = vmatpush1.msra.mxu0 0.0
    %160 = vmatprep.subr.mxu0 0.0
    %161 = vmatpush1.msra.mxu0 0.0
    %162 = vmatprep.subr.mxu0 0.0
    %163 = vmatpush1.msra.mxu0 0.0
    %164 = vmatprep.subr.mxu0 0.0
    %165 = vmatpush1.msra.mxu0 0.0
    %166 = vmatprep.subr.mxu0 0.0
    %167 = vmatpush1.msra.mxu0 0.0
    %168 = vmatprep.subr.mxu0 0.0
    %169 = vmatpush1.msra.mxu0 0.0
    %170 = vmatprep.subr.mxu0 0.0
    %171 = vmatpush1.msra.mxu0 0.0
    %172 = vmatprep.subr.mxu0 0.0
    %173 = vmatpush1.msra.mxu0 0.0
    %174 = vmatprep.mubr.f32.mxu0 0.0
    %175 = vmatmul.mubr.f32.gmra.mrb[0].mxu0 %v62
    %v176 = vpop.f32.mrb[0].mxu0
    %v177 = vadd.f32 %v103, %v176
    %v178 = vpop.f32.mrb[0].mxu0
    %v179 = vadd.f32 %v107, %v178
    %180 = vmatprep.mubr.f32.mxu0 0.0
    %181 = vmatmul.mubr.f32.gmra.mrb[0].mxu0 %v63
    %v182 = vpop.f32.mrb[0].mxu0
    %v183 = vadd.f32 %v103, %v182
    %v184 = vpop.f32.mrb[0].mxu0
    %v185 = vadd.f32 %v107, %v184
    %186 = vmatprep.mubr.f32.mxu0 0.0
    %187 = vmatmul.mubr.f32.gmra.mrb[0].mxu0 %v64
    %v188 = vpop.f32.mrb[0].mxu0
    %v189 = vadd.f32 %v103, %v188
    %v190 = vpop.f32.mrb[0].mxu0
    %v191 = vadd.f32 %v107, %v190
    %192 = vmatprep.mubr.f32.mxu0 0.0
    %193 = vmatmul.mubr.f32.gmra.mrb[0].mxu0 %v65
    %v194 = vpop.f32.mrb[0].mxu0
    %v195 = vadd.f32 %v103, %v194
    %v196 = vpop.f32.mrb[0].mxu0
    %v197 = vadd.f32 %v107, %v196
    %198 = vdwg.mxu0
    %v199 = vmax.f32 %v177, 0.0
    %v200 = vmax.f32 %v179, 0.0
    %v201 = vmax.f32 %v183, 0.0
    %v202 = vmax.f32 %v185, 0.0
    %v203 = vmax.f32 %v189, 0.0
    %v204 = vmax.f32 %v191, 0.0
    %v205 = vmax.f32 %v195, 0.0
    %v206 = vmax.f32 %v197, 0.0
    %v207 = vld [vmem:[#allocation7] sm:$0xff]
    %v208 = vld [vmem:[#allocation7 + $0x8] sm:$0xff]
    %v209 = vld [vmem:[#allocation7 + $0x10] sm:$0xff]
    %v210 = vld [vmem:[#allocation7 + $0x18] sm:$0xff]
    %v211 = vld [vmem:[#allocation7 + $0x20] sm:$0xff]
    %v212 = vld [vmem:[#allocation7 + $0x28] sm:$0xff]
    %v213 = vld [vmem:[#allocation7 + $0x30] sm:$0xff]
    %v214 = vld [vmem:[#allocation7 + $0x38] sm:$0xff]
    %v215 = vld [vmem:[#allocation7 + $0x40] sm:$0xff]
    %v216 = vld [vmem:[#allocation7 + $0x48] sm:$0xff]
    %v217 = vld [vmem:[#allocation7 + $0x50] sm:$0xff]
    %v218 = vld [vmem:[#allocation7 + $0x58] sm:$0xff]
    %v219 = vld [vmem:[#allocation7 + $0x60] sm:$0xff]
    %v220 = vld [vmem:[#allocation7 + $0x68] sm:$0xff]
    %v221 = vld [vmem:[#allocation7 + $0x70] sm:$0xff]
    %v222 = vld [vmem:[#allocation7 + $0x78] sm:$0xff]
    %v223 = vld [vmem:[#allocation7 + $0x80] sm:$0xff]
    %v224 = vld [vmem:[#allocation7 + $0x88] sm:$0xff]
    %v225 = vld [vmem:[#allocation7 + $0x90] sm:$0xff]
    %v226 = vld [vmem:[#allocation7 + $0x98] sm:$0xff]
    %v227 = vld [vmem:[#allocation7 + $0xa0] sm:$0xff]
    %v228 = vld [vmem:[#allocation7 + $0xa8] sm:$0xff]
    %v229 = vld [vmem:[#allocation7 + $0xb0] sm:$0xff]
    %v230 = vld [vmem:[#allocation7 + $0xb8] sm:$0xff]
    %v231 = vld [vmem:[#allocation7 + $0xc0] sm:$0xff]
    %v232 = vld [vmem:[#allocation7 + $0xc8] sm:$0xff]
    %v233 = vld [vmem:[#allocation7 + $0xd0] sm:$0xff]
    %v234 = vld [vmem:[#allocation7 + $0xd8] sm:$0xff]
    %v235 = vld [vmem:[#allocation7 + $0xe0] sm:$0xff]
    %v236 = vld [vmem:[#allocation7 + $0xe8] sm:$0xff]
    %v237 = vld [vmem:[#allocation7 + $0xf0] sm:$0xff]
    %v238 = vld [vmem:[#allocation7 + $0xf8] sm:$0xff]
    %v239 = vld [vmem:[%s4] sm:$0x1]
    %v241 = vlaneseq
    %v242 = vshrl.u32 %v241, 7
    %v243 = vsub.s32 0, %v242
    %v244 = vrot.slane %v239, %v243
    %246 = vmatprep.subr.mxu0 0.0
    %247 = vmatpush1.msra.mxu0 %v207
    %248 = vmatprep.subr.mxu0 0.0
    %249 = vmatpush1.msra.mxu0 %v208
    %250 = vmatprep.subr.mxu0 0.0
    %251 = vmatpush1.msra.mxu0 %v209
    %252 = vmatprep.subr.mxu0 0.0
    %253 = vmatpush1.msra.mxu0 %v210
    %254 = vmatprep.subr.mxu0 0.0
    %255 = vmatpush1.msra.mxu0 %v211
    %256 = vmatprep.subr.mxu0 0.0
    %257 = vmatpush1.msra.mxu0 %v212
    %258 = vmatprep.subr.mxu0 0.0
    %259 = vmatpush1.msra.mxu0 %v213
    %260 = vmatprep.subr.mxu0 0.0
    %261 = vmatpush1.msra.mxu0 %v214
    %262 = vmatprep.subr.mxu0 0.0
    %263 = vmatpush1.msra.mxu0 %v215
    %264 = vmatprep.subr.mxu0 0.0
    %265 = vmatpush1.msra.mxu0 %v216
    %266 = vmatprep.subr.mxu0 0.0
    %267 = vmatpush1.msra.mxu0 %v217
    %268 = vmatprep.subr.mxu0 0.0
    %269 = vmatpush1.msra.mxu0 %v218
    %270 = vmatprep.subr.mxu0 0.0
    %271 = vmatpush1.msra.mxu0 %v219
    %272 = vmatprep.subr.mxu0 0.0
    %273 = vmatpush1.msra.mxu0 %v220
    %274 = vmatprep.subr.mxu0 0.0
    %275 = vmatpush1.msra.mxu0 %v221
    %276 = vmatprep.subr.mxu0 0.0
    %277 = vmatpush1.msra.mxu0 %v222
    %278 = vmatprep.subr.mxu0 0.0
    %279 = vmatpush1.msra.mxu0 %v223
    %280 = vmatprep.subr.mxu0 0.0
    %281 = vmatpush1.msra.mxu0 %v224
    %282 = vmatprep.subr.mxu0 0.0
    %283 = vmatpush1.msra.mxu0 %v225
    %284 = vmatprep.subr.mxu0 0.0
    %285 = vmatpush1.msra.mxu0 %v226
    %286 = vmatprep.subr.mxu0 0.0
    %287 = vmatpush1.msra.mxu0 %v227
    %288 = vmatprep.subr.mxu0 0.0
    %289 = vmatpush1.msra.mxu0 %v228
    %290 = vmatprep.subr.mxu0 0.0
    %291 = vmatpush1.msra.mxu0 %v229
    %292 = vmatprep.subr.mxu0 0.0
    %293 = vmatpush1.msra.mxu0 %v230
    %294 = vmatprep.subr.mxu0 0.0
    %295 = vmatpush1.msra.mxu0 %v231
    %296 = vmatprep.subr.mxu0 0.0
    %297 = vmatpush1.msra.mxu0 %v232
    %298 = vmatprep.subr.mxu0 0.0
    %299 = vmatpush1.msra.mxu0 %v233
    %300 = vmatprep.subr.mxu0 0.0
    %301 = vmatpush1.msra.mxu0 %v234
    %302 = vmatprep.subr.mxu0 0.0
    %303 = vmatpush1.msra.mxu0 %v235
    %304 = vmatprep.subr.mxu0 0.0
    %305 = vmatpush1.msra.mxu0 %v236
    %306 = vmatprep.subr.mxu0 0.0
    %307 = vmatpush1.msra.mxu0 %v237
    %308 = vmatprep.subr.mxu0 0.0
    %309 = vmatpush1.msra.mxu0 %v238
    %310 = vmatprep.mubr.f32.mxu0 %v200
    %311 = vmatmul.mubr.f32.gmra.mrb[0].mxu0 %v199
    %v312 = vpop.f32.mrb[0].mxu0
    %v313 = vadd.f32 %v244, %v312
    %v314 = vpop.f32.mrb[0].mxu0
    %315 = vmatprep.mubr.f32.mxu0 %v202
    %316 = vmatmul.mubr.f32.gmra.mrb[0].mxu0 %v201
    %v317 = vpop.f32.mrb[0].mxu0
    %v318 = vadd.f32 %v244, %v317
    %v319 = vpop.f32.mrb[0].mxu0
    %320 = vmatprep.mubr.f32.mxu0 %v204
    %321 = vmatmul.mubr.f32.gmra.mrb[0].mxu0 %v203
    %v322 = vpop.f32.mrb[0].mxu0
    %v323 = vadd.f32 %v244, %v322
    %v324 = vpop.f32.mrb[0].mxu0
    %325 = vmatprep.mubr.f32.mxu0 %v206
    %326 = vmatmul.mubr.f32.gmra.mrb[0].mxu0 %v205
    %v327 = vpop.f32.mrb[0].mxu0
    %v328 = vadd.f32 %v244, %v327
    %v329 = vpop.f32.mrb[0].mxu0
    %330 = vdwg.mxu0
    %331 = vst [vmem:[#allocation8] sm:$0xff] %v313
    %332 = vst [vmem:[#allocation8 + $0x8] sm:$0xff] %v318
    %333 = vst [vmem:[#allocation8 + $0x10] sm:$0xff] %v323
    %334 = vst [vmem:[#allocation8 + $0x18] sm:$0xff] %v328
    // Predicated region
    $region34: #{tpu_custom_call.1} parent=1 // pred_check
      _
    $region35: #{tpu_custom_call.1} parent=1 // pred_check_branch
      %336 = sbr.rel (0) target = $region37
    $region36: #{tpu_custom_call.1} parent=1 // pred_region
      %s338 = ssub.s32 512, 512
      %339 = vsyncadd [#allocation4], %s338
      %s340 = sshll.u32 [#allocation8], 4
      %s341 = int_to_ptr.vmem [resolvable:$true] %s340
      %346 = dma.vmem_to_hbm [thread:$0]  %s341, 512, %s5, [#allocation4], 128, 128, 8
    $region37: #{tpu_custom_call.1} parent=1 // pred_fallthru
      _
    // Predicated region
    $region38: #{tpu_custom_call.1} parent=1 // pred_check
      _
    $region39: #{tpu_custom_call.1} parent=1 // pred_check_branch
      %348 = sbr.rel (0) target = $region41
    $region40: #{tpu_custom_call.1} parent=1 // pred_region
      %349 = dma.done [#allocation4], 512
    $region41: #{tpu_custom_call.1} parent=1 // pred_fallthru
      _
    %350 = vsyncpa [#allocation3], 1
    %351 = vsyncpa [#allocation6], 1
    %352 = vsyncpa [#allocation4], 1

</llo_original>
